<compile_context>
chip_gen: v7x
topology: tpu7x:2x2x1
jax: 0.10.0
libtpu: 0.0.40
codegen_flags: <defaults>
</compile_context>

<pallas_src>
import jax
import jax.numpy as jnp
from jax.experimental import pallas as pl
from jax.experimental.pallas import tpu as pltpu


def _postprocess_kernel(logits_ref, boxes_ref, size_ref, out_ref):
    # ----- scores / labels ------------------------------------------------
    logits = logits_ref[...]                                   # (N, C) f32
    num_classes = logits.shape[-1]

    row_max = jnp.max(logits, axis=-1, keepdims=True)          # (N, 1)
    col = jax.lax.broadcasted_iota(jnp.int32, logits.shape, 1)
    # first index attaining the max (matches torch.argmax tie-breaking);
    # argmax on raw logits == argmax on sigmoid(logits) (monotonic).
    labels = jnp.min(
        jnp.where(logits == row_max, col, jnp.int32(num_classes)),
        axis=-1, keepdims=True)                                # (N, 1) int32
    scores = jax.nn.sigmoid(row_max)                           # (N, 1) == max(sigmoid)

    # ----- boxes: cxcywh -> xyxy, scaled by (img_w, img_h) -----------------
    b = boxes_ref[...]                                         # (N, 4) f32
    img_w = size_ref[0]                                        # SMEM scalars
    img_h = size_ref[1]
    cx, cy = b[:, 0:1], b[:, 1:2]
    hw, hh = 0.5 * b[:, 2:3], 0.5 * b[:, 3:4]
    x1 = (cx - hw) * img_w
    y1 = (cy - hh) * img_h
    x2 = (cx + hw) * img_w
    y2 = (cy + hh) * img_h

    # ----- single lane-packed store: [x1, y1, x2, y2, score, label] --------
    # Labels are stored as exact integer-valued f32 (exact for C < 2^24) and
    # converted back to int32 in the wrapper.
    out_ref[...] = jnp.concatenate(
        [x1, y1, x2, y2, scores, labels.astype(jnp.float32)], axis=-1)


def tracker_post_process(pred_logits, pred_boxes, orig_image_size):
    """Returns (boxes_xyxy_scaled (N,4) f32, scores (N,) f32, labels (N,) int32).

    orig_image_size is unpacked as (img_w, img_h), matching the PyTorch module's
    `img_w, img_h = orig_image_size`.
    """
    img_w, img_h = orig_image_size
    N, C = pred_logits.shape
    size_wh = jnp.array([img_w, img_h], dtype=jnp.float32)

    packed = pl.pallas_call(
        _postprocess_kernel,
        in_specs=[
            pl.BlockSpec(memory_space=pltpu.MemorySpace.VMEM),   # logits (N, C)
            pl.BlockSpec(memory_space=pltpu.MemorySpace.VMEM),   # boxes  (N, 4)
            pl.BlockSpec(memory_space=pltpu.MemorySpace.SMEM),   # (img_w, img_h)
        ],
        out_specs=pl.BlockSpec(memory_space=pltpu.MemorySpace.VMEM),
        out_shape=jax.ShapeDtypeStruct((N, 6), jnp.float32),
    )(pred_logits.astype(jnp.float32), pred_boxes.astype(jnp.float32), size_wh)

    boxes = packed[:, 0:4]
    scores = packed[:, 4]
    labels = packed[:, 5].astype(jnp.int32)
    return boxes, scores, labels


def _reference(pred_logits, pred_boxes, orig_image_size):
    img_w, img_h = orig_image_size
    prob = jax.nn.sigmoid(pred_logits)
    scores = jnp.max(prob, axis=-1)
    labels = jnp.argmax(prob, axis=-1).astype(jnp.int32)
    cx, cy, w, h = jnp.split(pred_boxes, 4, axis=-1)
    boxes = jnp.concatenate(
        [cx - 0.5 * w, cy - 0.5 * h, cx + 0.5 * w, cy + 0.5 * h], axis=-1)
    scale = jnp.array([img_w, img_h, img_w, img_h], jnp.float32)
    return boxes * scale[None, :], scores, labels


if __name__ == "__main__":
    key = jax.random.PRNGKey(0)
    k1, k2 = jax.random.split(key)

    N, C = 8, 32                       # track queries, num_classes
    pred_logits = jax.random.normal(k1, (N, C), dtype=jnp.float32)
    pred_boxes = jax.random.uniform(k2, (N, 4), dtype=jnp.float32,
                                    minval=0.1, maxval=0.9)   # cxcywh in [0,1]
    orig_image_size = (640.0, 480.0)   # (img_w, img_h) -- module's convention

    boxes, scores, labels = tracker_post_process(pred_logits, pred_boxes,
                                                 orig_image_size)
    jax.block_until_ready((boxes, scores, labels))

    ref_boxes, ref_scores, ref_labels = _reference(pred_logits, pred_boxes,
                                                   orig_image_size)
    assert boxes.shape == (N, 4) and scores.shape == (N,) and labels.shape == (N,)
    assert jnp.allclose(boxes, ref_boxes, atol=1e-4, rtol=1e-4)
    assert jnp.allclose(scores, ref_scores, atol=1e-6, rtol=1e-6)
    assert jnp.array_equal(labels, ref_labels)

    print("KERNEL_OK")
</pallas_src>

<mosaic_0001>
module attributes {stable_mosaic.version = 11 : i64} {
  func.func @_postprocess_kernel(%arg0: memref<8x32xf32, #tpu.memory_space<vmem>>, %arg1: memref<8x4xf32, #tpu.memory_space<vmem>>, %arg2: memref<2xf32, #tpu.memory_space<smem>>, %arg3: memref<8x6xf32, #tpu.memory_space<vmem>>) attributes {dimension_semantics = [], scalar_prefetch = 0 : i64, scratch_operands = 0 : i64, tpu.core_type = #tpu.core_type<tc>} {
    %c0 = arith.constant 0 : index
    %c0_0 = arith.constant 0 : index
    %0 = vector.load %arg0[%c0, %c0_0] : memref<8x32xf32, #tpu.memory_space<vmem>>, vector<8x32xf32>
    %cst = arith.constant dense<0xFF800000> : vector<8xf32>
    %1 = vector.multi_reduction <maximumf>, %0, %cst [1] : vector<8x32xf32> to vector<8xf32>
    %2 = vector.shape_cast %1 : vector<8xf32> to vector<8x1xf32>
    %3 = tpu.iota {dimensions = array<i32: 1>} : vector<8x32xi32>
    %4 = vector.broadcast %2 : vector<8x1xf32> to vector<8x32xf32>
    %5 = arith.cmpf oeq, %0, %4 : vector<8x32xf32>
    %c32_i32 = arith.constant 32 : i32
    %6 = vector.broadcast %c32_i32 : i32 to vector<8x32xi32>
    %7 = arith.select %5, %3, %6 : vector<8x32xi1>, vector<8x32xi32>
    %cst_1 = arith.constant dense<2147483647> : vector<8xi32>
    %8 = vector.multi_reduction <minsi>, %7, %cst_1 [1] : vector<8x32xi32> to vector<8xi32>
    %9 = vector.shape_cast %8 : vector<8xi32> to vector<8x1xi32>
    %10 = arith.negf %2 : vector<8x1xf32>
    %11 = math.exp %10 : vector<8x1xf32>
    %cst_2 = arith.constant 1.000000e+00 : f32
    %12 = vector.broadcast %cst_2 : f32 to vector<8x1xf32>
    %13 = arith.addf %12, %11 : vector<8x1xf32>
    %14 = arith.divf %12, %13 : vector<8x1xf32>
    %c0_3 = arith.constant 0 : index
    %c0_4 = arith.constant 0 : index
    %15 = vector.load %arg1[%c0_3, %c0_4] : memref<8x4xf32, #tpu.memory_space<vmem>>, vector<8x4xf32>
    %c0_5 = arith.constant 0 : index
    %16 = memref.load %arg2[%c0_5] : memref<2xf32, #tpu.memory_space<smem>>
    %c1 = arith.constant 1 : index
    %17 = memref.load %arg2[%c1] : memref<2xf32, #tpu.memory_space<smem>>
    %18 = vector.extract_strided_slice %15 {offsets = [0, 0], sizes = [8, 1], strides = [1, 1]} : vector<8x4xf32> to vector<8x1xf32>
    %19 = vector.extract_strided_slice %15 {offsets = [0, 1], sizes = [8, 1], strides = [1, 1]} : vector<8x4xf32> to vector<8x1xf32>
    %20 = vector.extract_strided_slice %15 {offsets = [0, 2], sizes = [8, 1], strides = [1, 1]} : vector<8x4xf32> to vector<8x1xf32>
    %cst_6 = arith.constant 5.000000e-01 : f32
    %21 = vector.broadcast %cst_6 : f32 to vector<8x1xf32>
    %22 = arith.mulf %21, %20 : vector<8x1xf32>
    %23 = vector.extract_strided_slice %15 {offsets = [0, 3], sizes = [8, 1], strides = [1, 1]} : vector<8x4xf32> to vector<8x1xf32>
    %cst_7 = arith.constant 5.000000e-01 : f32
    %24 = vector.broadcast %cst_7 : f32 to vector<8x1xf32>
    %25 = arith.mulf %24, %23 : vector<8x1xf32>
    %26 = arith.subf %18, %22 : vector<8x1xf32>
    %27 = vector.broadcast %16 : f32 to vector<8x1xf32>
    %28 = arith.mulf %26, %27 : vector<8x1xf32>
    %29 = arith.subf %19, %25 : vector<8x1xf32>
    %30 = vector.broadcast %17 : f32 to vector<8x1xf32>
    %31 = arith.mulf %29, %30 : vector<8x1xf32>
    %32 = arith.addf %18, %22 : vector<8x1xf32>
    %33 = vector.broadcast %16 : f32 to vector<8x1xf32>
    %34 = arith.mulf %32, %33 : vector<8x1xf32>
    %35 = arith.addf %19, %25 : vector<8x1xf32>
    %36 = vector.broadcast %17 : f32 to vector<8x1xf32>
    %37 = arith.mulf %35, %36 : vector<8x1xf32>
    %38 = arith.sitofp %9 : vector<8x1xi32> to vector<8x1xf32>
    %39 = tpu.concatenate %28, %31, %34, %37, %14, %38 in 1 : vector<8x1xf32>, vector<8x1xf32>, vector<8x1xf32>, vector<8x1xf32>, vector<8x1xf32>, vector<8x1xf32> -> vector<8x6xf32>
    %c0_8 = arith.constant 0 : index
    %c0_9 = arith.constant 0 : index
    %40 = vector.load %arg3[%c0_8, %c0_9] : memref<8x6xf32, #tpu.memory_space<vmem>>, vector<8x6xf32>
    tpu.vector_store %arg3[%c0_8, %c0_9], %39 {strides = array<i32>} : memref<8x6xf32, #tpu.memory_space<vmem>>, vector<8x6xf32>,
    return
  }
}

</mosaic_0001>

<llo_original>
// kernel: tpu_custom_call.1
$region0: #{tpu_custom_call.1}
  #allocation0 [shape = 'u32[]', space=smem, size = 0x4, offset = 0x4, fixed_abs, tag = 'smem constant byte address 0x4 - core index']
  #allocation1 [shape = 'u32[144,128]{1,0:T(1,128)}', space=vmem, size = 0x12000, scoped, tag = 'internal scratch']
  %s0 = inlined_call_operand.vmem [shape: f32[8,32], index: 0, kind: input, shape index: {}]
  %s1 = inlined_call_operand.vmem [shape: f32[8,4], index: 1, kind: input, shape index: {}]
  %s2 = inlined_call_operand.vmem [shape: f32[2], index: 2, kind: input, shape index: {}]
  %s3 = inlined_call_operand.hbm [shape: f32[8,6], index: 3, kind: output, shape index: {}]
  %s4 = sld [smem:[#allocation0]]
  $region26: #{tpu_custom_call.1} parent=0
    _
  %s6 = ssub.s32 1, %s4
  %s7 = scalar_select 0, %s6, %s4
  $region1: #{tpu_custom_call.1} parent=0
    #allocation2 [shape = 'u8[512]{0}', space=smem, size = 0x200, scoped, tag = 'input window, operand 2, single buffered']
    #allocation3 [shape = 's32[1]{0}', space=sflag, size = 0x4, scoped, tag = 'scoped memory for tpu_custom_call.1']
    #allocation4 [shape = 's32[1]{0}', space=sflag, size = 0x4, scoped, tag = 'scoped memory for tpu_custom_call.1']
    #allocation5 [shape = 'u8[4096]{0}', space=vmem, size = 0x1000, scoped, tag = 'output window, operand 0, single buffered']
    %8 = vsyncpa [#allocation4], 0
    %9 = vsyncpa [#allocation3], 0
    // Predicated region
    $region2: #{tpu_custom_call.1} parent=1 // pred_check
      _
    $region3: #{tpu_custom_call.1} parent=1 // pred_check_branch
      %11 = sbr.rel (0) target = $region5
    $region4: #{tpu_custom_call.1} parent=1 // pred_region
      _
    $region5: #{tpu_custom_call.1} parent=1 // pred_fallthru
      _
    // Predicated region
    $region6: #{tpu_custom_call.1} parent=1 // pred_check
      _
    $region7: #{tpu_custom_call.1} parent=1 // pred_check_branch
      %13 = sbr.rel (0) target = $region9
    $region8: #{tpu_custom_call.1} parent=1 // pred_region
      _
    $region9: #{tpu_custom_call.1} parent=1 // pred_fallthru
      _
    // Predicated region
    $region10: #{tpu_custom_call.1} parent=1 // pred_check
      _
    $region11: #{tpu_custom_call.1} parent=1 // pred_check_branch
      %15 = sbr.rel (0) target = $region13
    $region12: #{tpu_custom_call.1} parent=1 // pred_region
      %s17 = ssub.s32 16, 16
      %18 = vsyncadd [#allocation4], %s17
      %s20 = sshll.u32 %s2, 4
      %s21 = int_to_ptr.vmem [resolvable:$true] %s20
      %23 = dma.vmem_to_smem %s21, 16, [#allocation2], [#allocation4]
    $region13: #{tpu_custom_call.1} parent=1 // pred_fallthru
      _
    // Predicated region
    $region14: #{tpu_custom_call.1} parent=1 // pred_check
      _
    $region15: #{tpu_custom_call.1} parent=1 // pred_check_branch
      %25 = sbr.rel (0) target = $region17
    $region16: #{tpu_custom_call.1} parent=1 // pred_region
      %26 = dma.done [#allocation4], 16
    $region17: #{tpu_custom_call.1} parent=1 // pred_fallthru
      _
    %27 = sfence
    %v28 = vld [vmem:[%s0] sm:$0xff]
    %vm29 = vcmask 261120
    %v30 = vsel %vm29, %v28, -inf
    %31 = vmax.xlane.f32.xlu0 %v30
    %v32 = vpop.xlane.xlu0 %31
    %v33 = vlaneseq
    %v34 = vand.u32 %v33, 127
    %vm35 = vcmp.eq.f32.partialorder %v28, %v32
    %v36 = vsel %vm35, %v34, 32
    %v37 = vsel %vm29, %v36, 2147483647
    %v38 = vand.u32 %v37, 65535
    %v39 = vshra.s32 %v37, 16
    %v40 = vcvt.s32.f32 %v38
    %v41 = vcvt.s32.f32 %v39
    %42 = vmin.xlane.f32.xlu0 %v41
    %v43 = vpop.xlane.xlu0 %42
    %vm44 = vcmp.eq.f32.partialorder %v41, %v43
    %v45 = vsel %vm44, %v40, inf
    %46 = vmin.xlane.f32.xlu0 %v45
    %v47 = vpop.xlane.xlu0 %46
    %v48 = vcvt.f32.s32 %v47
    %v49 = vcvt.f32.s32 %v43
    %v50 = vshll.u32 %v49, 16
    %v51 = vadd.s32 %v50, %v48
    %v52 = vxor.u32 %v32, 2147483648
    %v53 = vmul.f32 %v52, 1.442695
    %v54 = vpow.pop %v53
    %v55 = vadd.f32 %v54, 1.0
    %v56 = vrcp.pop %v55
    %v57 = vmul.f32 1.0, %v56
    %v58 = vld [vmem:[%s1] sm:$0xff]
    %s59 = sld [smem:[#allocation2]]
    %s60 = sld [smem:[#allocation2 + $0x1]]
    %v61 = vmul.f32 %v58, 0.5
    %63 = vrot.lane.b32.xlu0 %v61, 126
    %v64 = vpop.permute.xlu0 %63
    %v66 = vsub.f32 %v58, %v64
    %v67 = vstv %s59
    %v68 = vmul.f32 %v66, %v67
    %v69 = vstv %s60
    %v70 = vmul.f32 %v66, %v69
    %v71 = vadd.f32 %v58, %v64
    %v72 = vmul.f32 %v71, %v67
    %v73 = vmul.f32 %v71, %v69
    %v74 = vcvt.s32.f32 %v51
    %76 = vrot.lane.b32.xlu0 %v72, 2
    %v77 = vpop.permute.xlu0 %76
    %80 = vrot.lane.b32.xlu0 %v73, 2
    %v81 = vpop.permute.xlu0 %80
    %vm83 = vcmask 7168
    %v84 = vsel %vm83, %v68, %v70
    %vm85 = vcmask 15360
    %v86 = vsel %vm85, %v84, %v77
    %vm87 = vcmask 23552
    %v88 = vsel %vm87, %v86, %v81
    %vm89 = vcmask 31744
    %v90 = vsel %vm89, %v88, %v57
    %vm91 = vcmask 39936
    %v92 = vsel %vm91, %v90, %v74
    %vm93 = vcmask 48128
    %94 = vst.msk [vmem:[#allocation5] sm:$0xff] %vm93, %v92
    // Predicated region
    $region18: #{tpu_custom_call.1} parent=1 // pred_check
      _
    $region19: #{tpu_custom_call.1} parent=1 // pred_check_branch
      %96 = sbr.rel (0) target = $region21
    $region20: #{tpu_custom_call.1} parent=1 // pred_region
      %s98 = ssub.s32 128, 128
      %99 = vsyncadd [#allocation3], %s98
      %s101 = sshll.u32 [#allocation5], 4
      %s102 = int_to_ptr.vmem [resolvable:$true] %s101
      %104 = dma.vmem_to_hbm [thread:$0]  %s102, 128, %s3, [#allocation3]
    $region21: #{tpu_custom_call.1} parent=1 // pred_fallthru
      _
    // Predicated region
    $region22: #{tpu_custom_call.1} parent=1 // pred_check
      _
    $region23: #{tpu_custom_call.1} parent=1 // pred_check_branch
      %106 = sbr.rel (0) target = $region25
    $region24: #{tpu_custom_call.1} parent=1 // pred_region
      %107 = dma.done [#allocation3], 128
    $region25: #{tpu_custom_call.1} parent=1 // pred_fallthru
      _
    %108 = vsyncpa [#allocation3], 1
    %109 = vsyncpa [#allocation4], 1

</llo_original>
